<compile_context>
chip_gen: v6e
topology: v6e:2x2x1
jax: 0.10.0
libtpu: 0.0.40
codegen_flags: <defaults>
</compile_context>

<pallas_src>
import functools
import math

import jax
import jax.numpy as jnp
from jax import lax
from jax.experimental import pallas as pl
from jax.experimental.pallas import tpu as pltpu


_VMEM_CAP = 48 * 1024 * 1024  # conservative cap: v7x has 64 MiB physical VMEM/TC


# ---------------------------------------------------------------------------
# Tiling helpers (always produce legal blocks: full-dim OR (8,128)-aligned)
# ---------------------------------------------------------------------------
def _round_up(x, m):
    return ((x + m - 1) // m) * m


def _pick_tile(dim, target, align):
    """Return (tile, padded_dim).

    dim <= target  -> untiled: block spans the full (unpadded) dim (always legal).
    dim >  target  -> an `align`-aligned tile; the dim is padded to a multiple.
    """
    if dim <= target:
        return dim, dim
    tile = max(align, (target // align) * align)
    return tile, _round_up(dim, tile)


def _pad_to(x, axis, new_size):
    if x.shape[axis] == new_size:
        return x
    pads = [(0, 0)] * x.ndim
    pads[axis] = (0, new_size - x.shape[axis])
    return jnp.pad(x, pads)


# ---------------------------------------------------------------------------
# Stacked / tiled linear kernel:  out[p] = x[p or 0] @ wt[p] + b[p]
#   grid = (P, N/tn, M/tm, K/tk)  (K innermost; M second-innermost so the
#   weight block is re-used across M steps when tk == Din).
# ---------------------------------------------------------------------------
def stacked_linear_kernel(x_ref, wt_ref, b_ref, o_ref, acc_ref):
    k_idx = pl.program_id(3)

    @pl.when(k_idx == 0)
    def _init():
        acc_ref[...] = jnp.zeros_like(acc_ref)

    acc_ref[...] += jnp.dot(
        x_ref[0], wt_ref[0], preferred_element_type=jnp.float32
    )

    @pl.when(k_idx == pl.num_programs(3) - 1)
    def _finalize():
        o_ref[0] = (acc_ref[...] + b_ref[0]).astype(o_ref.dtype)


def stacked_linear(x_stk, wt_stk, b_stk, *, tm_target=512, tn_target=512,
                   tk_target=512, out_dtype=jnp.bfloat16):
    """x_stk: (Px, M, Din) with Px in {1, P} (Px == 1 broadcasts the activation);
    wt_stk: (P, Din, Dout) pre-transposed bf16; b_stk: (P, 1, Dout) f32.

    Returns (P, M, Dout) in `out_dtype` (default bf16)."""
    Px, M, Din = x_stk.shape
    P, _, Dout = wt_stk.shape
    broadcast_x = (Px == 1 and P > 1)

    tm, Mp = _pick_tile(M, tm_target, 8)
    tn, Np = _pick_tile(Dout, tn_target, 128)
    # Weight-resident blocking whenever the double-buffered weight block fits a
    # modest VMEM budget (covers d_model up to several K on v5e/v6e; smaller
    # tiles / K-tiling kick in automatically beyond that, which also keeps v7x's
    # 64 MiB VMEM happy).
    if Din * tn * 2 * 2 <= 16 * 1024 * 1024:
        tk, Kp = Din, Din
    else:
        tk, Kp = _pick_tile(Din, tk_target, 128)

    x_p = _pad_to(_pad_to(x_stk, 1, Mp), 2, Kp).astype(jnp.bfloat16)
    wt_p = _pad_to(_pad_to(wt_stk, 1, Kp), 2, Np).astype(jnp.bfloat16)
    b_p = _pad_to(b_stk, 2, Np).astype(jnp.float32)

    grid = (P, Np // tn, Mp // tm, Kp // tk)

    block_bytes = 2 * (tm * tk * 2 + tk * tn * 2 + tn * 4 + tm * tn * 2) + tm * tn * 4
    vmem_limit = min(max(2 * block_bytes, 16 * 1024 * 1024), _VMEM_CAP)

    out = pl.pallas_call(
        stacked_linear_kernel,
        out_shape=jax.ShapeDtypeStruct((P, Mp, Np), out_dtype),
        grid=grid,
        in_specs=[
            pl.BlockSpec((1, tm, tk),
                         lambda p, j, i, k: ((0 if broadcast_x else p), i, k)),
            pl.BlockSpec((1, tk, tn), lambda p, j, i, k: (p, k, j)),
            pl.BlockSpec((1, 1, tn), lambda p, j, i, k: (p, 0, j)),
        ],
        out_specs=pl.BlockSpec((1, tm, tn), lambda p, j, i, k: (p, i, j)),
        scratch_shapes=[pltpu.VMEM((tm, tn), jnp.float32)],
        compiler_params=pltpu.CompilerParams(
            dimension_semantics=("parallel", "parallel", "parallel", "arbitrary"),
            vmem_limit_bytes=vmem_limit,
        ),
    )(x_p, wt_p, b_p)

    if Mp != M or Np != Dout:
        out = out[:, :M, :Dout]
    return out


# ---------------------------------------------------------------------------
# Scaled dot-product attention: grid over (batch, head), head-major blocks.
# ---------------------------------------------------------------------------
def attn_kernel(q_ref, k_ref, v_ref, bias_ref, o_ref, w_ref=None, *, scale):
    # q/k/v/o blocks: (1, 1, S, d_head); bias / w blocks: (1, 1, S, S).
    q = (q_ref[0, 0].astype(jnp.float32) * scale).astype(jnp.bfloat16)
    k = k_ref[0, 0]
    v = v_ref[0, 0]
    # QK^T contracting the last dims (no explicit transpose), f32 accumulation.
    scores = lax.dot_general(
        q, k, (((1,), (1,)), ((), ())), preferred_element_type=jnp.float32
    )
    # Additive 0 / -1e30 bias (finite: a fully-masked query row yields a uniform
    # distribution instead of NaN; identical to the -inf reference otherwise).
    scores = scores + bias_ref[0, 0].astype(jnp.float32)
    scores = scores - jnp.max(scores, axis=-1, keepdims=True)
    p = jnp.exp(scores)
    # EUP reciprocal co-issues with VALU work; cheaper than an SxS divide.
    weights = p * pl.reciprocal(jnp.sum(p, axis=-1, keepdims=True), approx=True)
    o_ref[0, 0] = jnp.dot(
        weights.astype(jnp.bfloat16), v, preferred_element_type=jnp.float32
    ).astype(o_ref.dtype)
    if w_ref is not None:
        w_ref[0, 0] = weights.astype(w_ref.dtype)


def scaled_dot_product_attention_pallas(qs, ks, vs, mask, *, return_weights=True):
    """qs/ks/vs: (B, H, S, d_head) bf16 head-major.
    mask: (S, S), (1, 1, S, S), (B, 1, S, S) or (B, H, S, S); 0 => masked.

    Returns (out (B, H, S, d_head) bf16, weights (B, H, S, S) bf16 or None)."""
    B, H, S, dh = qs.shape

    # Additive bias at the mask's NATURAL shape (no HBM broadcast), bf16.
    bias = jnp.where(mask == 0, jnp.float32(-1e30), jnp.float32(0.0))
    bias = bias.reshape((-1, 1, S, S)).astype(jnp.bfloat16)
    Bm = bias.shape[0]
    if Bm == 1:
        bias_map = lambda b, h: (0, 0, 0, 0)
    elif Bm == B:
        bias_map = lambda b, h: (b, 0, 0, 0)
    else:  # (B, H, S, S) flattened to (B*H, 1, S, S)
        bias_map = lambda b, h: (b * H + h, 0, 0, 0)

    out_shapes = [jax.ShapeDtypeStruct((B, H, S, dh), jnp.bfloat16)]
    out_specs = [pl.BlockSpec((1, 1, S, dh), lambda b, h: (b, h, 0, 0))]
    if return_weights:
        out_shapes.append(jax.ShapeDtypeStruct((B, H, S, S), jnp.bfloat16))
        out_specs.append(pl.BlockSpec((1, 1, S, S), lambda b, h: (b, h, 0, 0)))

    block_bytes = 2 * (4 * S * dh * 2 + S * S * 2
                       + (S * S * 2 if return_weights else 0))
    vmem_limit = min(max(4 * block_bytes, 16 * 1024 * 1024), _VMEM_CAP)

    # TODO(synk): for S beyond ~1-2K convert to a flash-style tiled kernel
    # (grid over q-tiles x kv-tiles with m/l/acc scratch) so the S^2 scores
    # never materialize; the full weights output only makes sense at small S.
    outs = pl.pallas_call(
        functools.partial(attn_kernel, scale=1.0 / math.sqrt(float(dh))),
        out_shape=tuple(out_shapes),
        grid=(B, H),
        in_specs=[
            pl.BlockSpec((1, 1, S, dh), lambda b, h: (b, h, 0, 0)),
            pl.BlockSpec((1, 1, S, dh), lambda b, h: (b, h, 0, 0)),
            pl.BlockSpec((1, 1, S, dh), lambda b, h: (b, h, 0, 0)),
            pl.BlockSpec((1, 1, S, S), bias_map),
        ],
        out_specs=tuple(out_specs),
        compiler_params=pltpu.CompilerParams(
            dimension_semantics=("parallel", "parallel"),
            vmem_limit_bytes=vmem_limit,
        ),
    )(qs, ks, vs, bias)

    if return_weights:
        return outs[0], outs[1]
    return outs[0], None


# ---------------------------------------------------------------------------
# MultiHeadSelfAttention forward
# ---------------------------------------------------------------------------
def mhsa_forward(q, k, v, mask, prepped, num_heads, *, return_weights=True):
    B, S, D = q.shape
    M = B * S
    d_head = D // num_heads

    # Fused Q/K/V projection. For true self-attention (q is k is v) the single
    # activation is broadcast over the projection axis inside the GEMM's
    # index_map -- no HBM stack/copy of the activations.
    if q is k and q is v:
        x_stk = q.reshape(1, M, D)
    else:
        x_stk = jnp.stack([q.reshape(M, D), k.reshape(M, D), v.reshape(M, D)])
    qkv = stacked_linear(x_stk.astype(jnp.bfloat16),
                         prepped["qkv_wt"], prepped["qkv_b"])       # (3, M, D) bf16

    # split_heads -> head-major (B, H, S, d_head) so attention grids over
    # (batch, head) with full-d_head (lane-legal) blocks.
    # TODO(synk): fold this layout change into the QKV GEMM's out BlockSpec.
    def split(x2d):
        return x2d.reshape(B, S, num_heads, d_head).transpose(0, 2, 1, 3)

    qs, ks, vs = split(qkv[0]), split(qkv[1]), split(qkv[2])

    attn_out, attn_w = scaled_dot_product_attention_pallas(
        qs, ks, vs, mask, return_weights=return_weights)

    # merge_heads + output dense projection (same tiled GEMM, P = 1).
    merged = attn_out.transpose(0, 2, 1, 3).reshape(1, M, D)
    out = stacked_linear(merged, prepped["dense_wt"], prepped["dense_b"])[0]
    return out.reshape(B, S, D), attn_w


# ---------------------------------------------------------------------------
# Parameters: PyTorch-convention init + one-time prep (transpose, stack, bf16)
# ---------------------------------------------------------------------------
def init_params(key, d_model):
    bound = 1.0 / math.sqrt(d_model)
    params = {}
    for name in ["wq", "wk", "wv", "dense"]:
        key, kw, kb = jax.random.split(key, 3)
        params[f"{name}_w"] = jax.random.uniform(
            kw, (d_model, d_model), jnp.float32, -bound, bound)
        params[f"{name}_b"] = jax.random.uniform(
            kb, (d_model,), jnp.float32, -bound, bound)
    return params


def prepare_params(params):
    """One-time: transpose weights to (Din, Dout), stack Q/K/V, cast to bf16."""
    return {
        "qkv_wt": jnp.stack(
            [params["wq_w"].T, params["wk_w"].T, params["wv_w"].T]
        ).astype(jnp.bfloat16),                                      # (3, D, D)
        "qkv_b": jnp.stack(
            [params["wq_b"], params["wk_b"], params["wv_b"]]
        )[:, None, :].astype(jnp.float32),                           # (3, 1, D)
        "dense_wt": params["dense_w"].T[None].astype(jnp.bfloat16),  # (1, D, D)
        "dense_b": params["dense_b"][None, None, :].astype(jnp.float32),
    }


# ---------------------------------------------------------------------------
# Pure-JAX f32 reference for verification
# ---------------------------------------------------------------------------
def mhsa_reference(q, k, v, mask, params, num_heads):
    B, S, D = q.shape
    dh = D // num_heads

    def lin(x, w, b):
        return x @ w.T + b

    def split(x):
        return x.reshape(B, S, num_heads, dh).transpose(0, 2, 1, 3)

    qs = split(lin(q, params["wq_w"], params["wq_b"]))
    ks = split(lin(k, params["wk_w"], params["wk_b"]))
    vs = split(lin(v, params["wv_w"], params["wv_b"]))
    scores = jnp.einsum("bhqd,bhkd->bhqk", qs, ks) / math.sqrt(float(dh))
    scores = jnp.where(mask == 0, -jnp.inf, scores)
    w = jax.nn.softmax(scores, axis=-1)
    out = jnp.einsum("bhqk,bhkd->bhqd", w, vs)
    merged = out.transpose(0, 2, 1, 3).reshape(B, S, D)
    return lin(merged, params["dense_w"], params["dense_b"]), w


if __name__ == "__main__":
    B, S, D, H = 2, 8, 32, 4

    key = jax.random.PRNGKey(0)
    key_x, key_q, key_k, key_v, key_p = jax.random.split(key, 5)
    x = jax.random.normal(key_x, (B, S, D), jnp.float32)
    # Causal mask at its natural (1, 1, S, S) shape; 0 => masked out.
    mask = jnp.tril(jnp.ones((S, S), jnp.float32))[None, None]

    params = init_params(key_p, D)
    prepped = prepare_params(params)

    # Self-attention path (q is k is v): exercises the broadcast-activation GEMM.
    out, attn_w = mhsa_forward(x, x, x, mask, prepped, H)
    out = jax.block_until_ready(out)
    attn_w = jax.block_until_ready(attn_w)

    ref_out, ref_w = mhsa_reference(x, x, x, mask, params, H)
    assert out.shape == (B, S, D) and attn_w.shape == (B, H, S, S)
    # bf16 MXU operands / bf16 outputs with f32 accumulation -> loose tolerances.
    assert jnp.allclose(attn_w.astype(jnp.float32), ref_w, atol=5e-2, rtol=5e-2), \
        float(jnp.max(jnp.abs(attn_w.astype(jnp.float32) - ref_w)))
    assert jnp.allclose(out.astype(jnp.float32), ref_out, atol=1e-1, rtol=1e-1), \
        float(jnp.max(jnp.abs(out.astype(jnp.float32) - ref_out)))

    # Distinct q/k/v path: exercises the stacked-activation GEMM.
    q2 = jax.random.normal(key_q, (B, S, D), jnp.float32)
    k2 = jax.random.normal(key_k, (B, S, D), jnp.float32)
    v2 = jax.random.normal(key_v, (B, S, D), jnp.float32)
    out2, attn_w2 = mhsa_forward(q2, k2, v2, mask, prepped, H)
    out2 = jax.block_until_ready(out2)
    ref_out2, ref_w2 = mhsa_reference(q2, k2, v2, mask, params, H)
    assert jnp.allclose(attn_w2.astype(jnp.float32), ref_w2, atol=5e-2, rtol=5e-2), \
        float(jnp.max(jnp.abs(attn_w2.astype(jnp.float32) - ref_w2)))
    assert jnp.allclose(out2.astype(jnp.float32), ref_out2, atol=1e-1, rtol=1e-1), \
        float(jnp.max(jnp.abs(out2.astype(jnp.float32) - ref_out2)))

    print("KERNEL_OK")
</pallas_src>

<mosaic_0001>
module attributes {stable_mosaic.version = 11 : i64} {
  func.func @stacked_linear_kernel(%arg0: i32, %arg1: i32, %arg2: i32, %arg3: i32, %arg4: memref<1x16x32xbf16, #tpu.memory_space<vmem>>, %arg5: memref<1x32x32xbf16, #tpu.memory_space<vmem>>, %arg6: memref<1x1x32xf32, #tpu.memory_space<vmem>>, %arg7: memref<1x16x32xbf16, #tpu.memory_space<vmem>>, %arg8: memref<16x32xf32, #tpu.memory_space<vmem>>) attributes {dimension_semantics = [#tpu.dimension_semantics<parallel>, #tpu.dimension_semantics<parallel>, #tpu.dimension_semantics<parallel>, #tpu.dimension_semantics<arbitrary>], iteration_bounds = array<i64: 3, 1, 1, 1>, scalar_prefetch = 0 : i64, scratch_operands = 1 : i64, tpu.core_type = #tpu.core_type<tc>, window_params = [{transform_indices = @transform_0, window_bounds = array<i64: 1, 16, 32>}, {transform_indices = @transform_1, window_bounds = array<i64: 1, 32, 32>}, {transform_indices = @transform_2, window_bounds = array<i64: 1, 1, 32>}, {transform_indices = @transform_3, window_bounds = array<i64: 1, 16, 32>}]} {
    %c0_i32 = arith.constant 0 : i32
    %0 = arith.cmpi eq, %arg3, %c0_i32 : i32
    %1 = arith.extui %0 : i1 to i32
    %c0_i32_0 = arith.constant 0 : i32
    %2 = arith.cmpi ne, %1, %c0_i32_0 : i32
    scf.if %2 {
      %cst_12 = arith.constant 0.000000e+00 : f32
      %14 = vector.broadcast %cst_12 : f32 to vector<16x32xf32>
      %c0_13 = arith.constant 0 : index
      %c0_14 = arith.constant 0 : index
      %15 = vector.load %arg8[%c0_13, %c0_14] : memref<16x32xf32, #tpu.memory_space<vmem>>, vector<16x32xf32>
      tpu.vector_store %arg8[%c0_13, %c0_14], %14 {strides = array<i32>} : memref<16x32xf32, #tpu.memory_space<vmem>>, vector<16x32xf32>,
    } else {
    }
    %c0 = arith.constant 0 : index
    %c0_1 = arith.constant 0 : index
    %3 = vector.load %arg8[%c0, %c0_1] : memref<16x32xf32, #tpu.memory_space<vmem>>, vector<16x32xf32>
    %c0_2 = arith.constant 0 : index
    %c0_3 = arith.constant 0 : index
    %c0_4 = arith.constant 0 : index
    %4 = vector.load %arg4[%c0_2, %c0_3, %c0_4] : memref<1x16x32xbf16, #tpu.memory_space<vmem>>, vector<1x16x32xbf16>
    %5 = vector.shape_cast %4 : vector<1x16x32xbf16> to vector<16x32xbf16>
    %c0_5 = arith.constant 0 : index
    %c0_6 = arith.constant 0 : index
    %c0_7 = arith.constant 0 : index
    %6 = vector.load %arg5[%c0_5, %c0_6, %c0_7] : memref<1x32x32xbf16, #tpu.memory_space<vmem>>, vector<1x32x32xbf16>
    %7 = vector.shape_cast %6 : vector<1x32x32xbf16> to vector<32x32xbf16>
    %cst = arith.constant dense<0.000000e+00> : vector<16x32xf32>
    %8 = tpu.matmul %5, %7, %cst {dimension_numbers = #tpu.dot_dimension_numbers<[1], [0], [0], [1], [0, 0, 1, 1], [], []>} : vector<16x32xbf16>, vector<32x32xbf16>, vector<16x32xf32> -> vector<16x32xf32>
    %9 = arith.addf %3, %8 : vector<16x32xf32>
    %c0_8 = arith.constant 0 : index
    %c0_9 = arith.constant 0 : index
    %10 = vector.load %arg8[%c0_8, %c0_9] : memref<16x32xf32, #tpu.memory_space<vmem>>, vector<16x32xf32>
    tpu.vector_store %arg8[%c0_8, %c0_9], %9 {strides = array<i32>} : memref<16x32xf32, #tpu.memory_space<vmem>>, vector<16x32xf32>,
    %c0_i32_10 = arith.constant 0 : i32
    %11 = arith.cmpi eq, %arg3, %c0_i32_10 : i32
    %12 = arith.extui %11 : i1 to i32
    %c0_i32_11 = arith.constant 0 : i32
    %13 = arith.cmpi ne, %12, %c0_i32_11 : i32
    scf.if %13 {
      %c0_12 = arith.constant 0 : index
      %c0_13 = arith.constant 0 : index
      %14 = vector.load %arg8[%c0_12, %c0_13] : memref<16x32xf32, #tpu.memory_space<vmem>>, vector<16x32xf32>
      %c0_14 = arith.constant 0 : index
      %c0_15 = arith.constant 0 : index
      %c0_16 = arith.constant 0 : index
      %15 = vector.load %arg6[%c0_14, %c0_15, %c0_16] : memref<1x1x32xf32, #tpu.memory_space<vmem>>, vector<1x1x32xf32>
      %16 = vector.shape_cast %15 : vector<1x1x32xf32> to vector<1x32xf32>
      %17 = vector.broadcast %16 : vector<1x32xf32> to vector<16x32xf32>
      %18 = arith.addf %14, %17 : vector<16x32xf32>
      %19 = arith.truncf %18 : vector<16x32xf32> to vector<16x32xbf16>
      %c0_17 = arith.constant 0 : index
      %c0_18 = arith.constant 0 : index
      %c0_19 = arith.constant 0 : index
      %20 = vector.load %arg7[%c0_17, %c0_18, %c0_19] : memref<1x16x32xbf16, #tpu.memory_space<vmem>>, vector<1x16x32xbf16>
      %21 = vector.shape_cast %20 : vector<1x16x32xbf16> to vector<16x32xbf16>
      %22 = vector.shape_cast %19 : vector<16x32xbf16> to vector<1x16x32xbf16>
      tpu.vector_store %arg7[%c0_17, %c0_18, %c0_19], %22 {strides = array<i32>} : memref<1x16x32xbf16, #tpu.memory_space<vmem>>, vector<1x16x32xbf16>,
    } else {
    }
    return
  }
  func.func @transform_0(%arg0: i32, %arg1: i32, %arg2: i32, %arg3: i32) -> (i32, i32, i32) {
    %c0_i32 = arith.constant 0 : i32
    %c0_i32_0 = arith.constant 0 : i32
    return %c0_i32, %arg2, %arg3 : i32, i32, i32
  }
  func.func @transform_1(%arg0: i32, %arg1: i32, %arg2: i32, %arg3: i32) -> (i32, i32, i32) {
    %c0_i32 = arith.constant 0 : i32
    return %arg0, %arg3, %arg1 : i32, i32, i32
  }
  func.func @transform_2(%arg0: i32, %arg1: i32, %arg2: i32, %arg3: i32) -> (i32, i32, i32) {
    %c0_i32 = arith.constant 0 : i32
    %c0_i32_0 = arith.constant 0 : i32
    return %arg0, %c0_i32, %arg1 : i32, i32, i32
  }
  func.func @transform_3(%arg0: i32, %arg1: i32, %arg2: i32, %arg3: i32) -> (i32, i32, i32) {
    %c0_i32 = arith.constant 0 : i32
    return %arg0, %arg2, %arg1 : i32, i32, i32
  }
}

</mosaic_0001>

<llo_original>
// kernel: tpu_custom_call.1
$region0: #{tpu_custom_call.1}
  #allocation0 [shape = 'u32[]', space=smem, size = 0x4, offset = 0x4, fixed_abs, tag = 'smem constant byte address 0x4 - core index']
  #allocation1 [shape = 'u32[144,128]{1,0:T(1,128)}', space=vmem, size = 0x12000, scoped, tag = 'internal scratch']
  #allocation2 [shape = 'f32[16,32]{1,0:T(8,128)}', space=vmem, size = 0x2000, scoped, tag = 'scratch operand']
  %s0 = inlined_call_operand.hbm [shape: bf16[1,16,32], index: 0, kind: input, shape index: {}]
  %s1 = inlined_call_operand.hbm [shape: bf16[3,32,32], index: 1, kind: input, shape index: {}]
  %s2 = inlined_call_operand.vmem [shape: f32[3,1,32], index: 2, kind: input, shape index: {}]
  %s3 = inlined_call_operand.hbm [shape: bf16[3,16,32], index: 3, kind: output, shape index: {}]
  %s4 = sld [smem:[#allocation0]]
  $region61: #{tpu_custom_call.1} parent=0
    _
  %s6 = ssub.s32 1, %s4
  %s7 = scalar_select 0, %s6, %s4
  $region1: #{tpu_custom_call.1} parent=0
    #allocation3 [shape = 'u8[4096]{0}', space=vmem, size = 0x1000, scoped, tag = 'input window, operand 0, single buffered']
    #allocation4 [shape = 's32[2]{0}', space=sflag, size = 0x8, scoped, tag = 'scoped memory for tpu_custom_call.1']
    #allocation5 [shape = 's32[2]{0}', space=sflag, size = 0x8, scoped, tag = 'scoped memory for tpu_custom_call.1']
    #allocation6 [shape = 'u8[16384]{0}', space=vmem, size = 0x4000, scoped, tag = 'input window, operand 1']
    #allocation7 [shape = 's32[2]{0}', space=sflag, size = 0x8, scoped, tag = 'scoped memory for tpu_custom_call.1']
    #allocation8 [shape = 'u8[8192]{0}', space=vmem, size = 0x2000, scoped, tag = 'output window, operand 0']
    %8 = vsyncpa [#allocation4], 0
    %9 = vsyncpa [#allocation7], 0
    %s10 = scalar_lea.sflag [#allocation7], 1
    %11 = vsyncpa %s10, 0
    %12 = vsyncpa [#allocation5], 0
    %s13 = scalar_lea.sflag [#allocation5], 1
    %14 = vsyncpa %s13, 0
    loop: start=0, step=1, limit=5
    $region2: #{tpu_custom_call.1} parent=1 // loop_pre_header
      _
    $region3: #{tpu_custom_call.1} parent=1 // loop_header
      %s16 = sphi 0, %s20
      %p17 = scmp.ge.s32.totalorder %s16, 5
      %s23 = sphi 0, %s49
      %s24 = sphi 0, %s45
      %s25 = sphi 0, %s41
      %s26 = sphi 0, %s37
      %s27 = sphi 0, %s23
      %s28 = sphi 0, %s24
      %s29 = sphi 0, %s25
      %s30 = sphi 0, %s26
      %s31 = sphi 0, %s27
      %s32 = sphi 0, %s28
      %s33 = sphi 0, %s29
      %s34 = sphi 0, %s30
      %s54 = sphi 0, %s56
      %s57 = sphi 0, %s54
      %s58 = sphi 0, %s57
      %s74 = sphi 0, %s58
      %s84 = sphi 0, %s86
      %s87 = sphi 0, %s84
      %s88 = sphi 0, %s87
      %s104 = sphi 0, %s88
      %s112 = sphi 0, %s114
      %s115 = sphi 0, %s112
      %s116 = sphi 0, %s115
      %s132 = sphi 0, %s116
      %s142 = sphi 0, %s144
      %s145 = sphi 0, %s142
      %s146 = sphi 0, %s145
      %s162 = sphi 0, %s146
    $region4: #{tpu_custom_call.1} parent=1 // loop_header_branch
      %19 = sbr.rel (%p17) target = $region8
    $region5: #{tpu_custom_call.1} parent=1 // loop_body
      %s21 = ssub.s32 %s16, 1
      %s22 = ssub.s32 %s16, 2
      %s35 = sadd.s32 1, %s26
      %p36 = scmp.ge.s32.totalorder %s35, 1
      %s37 = scalar_select %p36, 0, %s35
      %s38 = sadd.s32 1, %s25
      %s39 = scalar_select %p36, %s38, %s25
      %p40 = scmp.ge.s32.totalorder %s39, 1
      %s41 = scalar_select %p40, 0, %s39
      %s42 = sadd.s32 1, %s24
      %s43 = scalar_select %p40, %s42, %s24
      %p44 = scmp.ge.s32.totalorder %s43, 1
      %s45 = scalar_select %p44, 0, %s43
      %s46 = sadd.s32 1, %s23
      %s47 = scalar_select %p44, %s46, %s23
      %p48 = scmp.ge.s32.totalorder %s47, 3
      %s49 = scalar_select %p48, 0, %s47
      %s50 = ssub.s32 %s25, %s41
      %s51 = ssub.s32 %s26, %s37
      %s52 = sor.u32 %s50, %s51
      %p53 = scmp.eq.s32.totalorder %s52, 0
      %s55 = sadd.s32 %s54, 1
      %s56 = scalar_select %p53, %s54, %s55
      %p59 = pneg %p53
      %p60 = scmp.eq.s32.totalorder %s16, 2
      %p61 = por %p59, %p60
      %p62 = scmp.ne.s32.totalorder %s54, %s57
      %p63 = scmp.eq.s32.totalorder %s16, 0
      %p64 = por %p62, %p63
      %p65 = scmp.ne.s32.totalorder %s54, %s57
      %p66 = scmp.eq.s32.totalorder %s21, 2
      %p67 = por %p65, %p66
      %p68 = scmp.ne.s32.totalorder %s57, %s58
      %p69 = scmp.eq.s32.totalorder %s21, 0
      %p70 = por %p68, %p69
      %p71 = scmp.ne.s32.totalorder %s57, %s58
      %p72 = scmp.eq.s32.totalorder %s22, 2
      %p73 = por %p71, %p72
      %p75 = scmp.ne.s32.totalorder %s58, %s74
      %p76 = scmp.eq.s32.totalorder %s22, 0
      %p77 = por %p75, %p76
      %s78 = ssub.s32 %s23, %s49
      %s79 = ssub.s32 %s26, %s37
      %s80 = sor.u32 %s78, %s79
      %s81 = ssub.s32 %s24, %s45
      %s82 = sor.u32 %s80, %s81
      %p83 = scmp.eq.s32.totalorder %s82, 0
      %s85 = sadd.s32 %s84, 1
      %s86 = scalar_select %p83, %s84, %s85
      %p89 = pneg %p83
      %p90 = scmp.eq.s32.totalorder %s16, 2
      %p91 = por %p89, %p90
      %p92 = scmp.ne.s32.totalorder %s84, %s87
      %p93 = scmp.eq.s32.totalorder %s16, 0
      %p94 = por %p92, %p93
      %p95 = scmp.ne.s32.totalorder %s84, %s87
      %p96 = scmp.eq.s32.totalorder %s21, 2
      %p97 = por %p95, %p96
      %p98 = scmp.ne.s32.totalorder %s87, %s88
      %p99 = scmp.eq.s32.totalorder %s21, 0
      %p100 = por %p98, %p99
      %p101 = scmp.ne.s32.totalorder %s87, %s88
      %p102 = scmp.eq.s32.totalorder %s22, 2
      %p103 = por %p101, %p102
      %p105 = scmp.ne.s32.totalorder %s88, %s104
      %p106 = scmp.eq.s32.totalorder %s22, 0
      %p107 = por %p105, %p106
      %s108 = ssub.s32 %s23, %s49
      %s109 = ssub.s32 %s24, %s45
      %s110 = sor.u32 %s108, %s109
      %p111 = scmp.eq.s32.totalorder %s110, 0
      %s113 = sadd.s32 %s112, 1
      %s114 = scalar_select %p111, %s112, %s113
      %p117 = pneg %p111
      %p118 = scmp.eq.s32.totalorder %s16, 2
      %p119 = por %p117, %p118
      %p120 = scmp.ne.s32.totalorder %s112, %s115
      %p121 = scmp.eq.s32.totalorder %s16, 0
      %p122 = por %p120, %p121
      %p123 = scmp.ne.s32.totalorder %s112, %s115
      %p124 = scmp.eq.s32.totalorder %s21, 2
      %p125 = por %p123, %p124
      %p126 = scmp.ne.s32.totalorder %s115, %s116
      %p127 = scmp.eq.s32.totalorder %s21, 0
      %p128 = por %p126, %p127
      %p129 = scmp.ne.s32.totalorder %s115, %s116
      %p130 = scmp.eq.s32.totalorder %s22, 2
      %p131 = por %p129, %p130
      %p133 = scmp.ne.s32.totalorder %s116, %s132
      %p134 = scmp.eq.s32.totalorder %s22, 0
      %p135 = por %p133, %p134
      %s136 = ssub.s32 %s23, %s49
      %s137 = ssub.s32 %s25, %s41
      %s138 = sor.u32 %s136, %s137
      %s139 = ssub.s32 %s24, %s45
      %s140 = sor.u32 %s138, %s139
      %p141 = scmp.eq.s32.totalorder %s140, 0
      %s143 = sadd.s32 %s142, 1
      %s144 = scalar_select %p141, %s142, %s143
      %p147 = pneg %p141
      %p148 = scmp.eq.s32.totalorder %s16, 2
      %p149 = por %p147, %p148
      %p150 = scmp.ne.s32.totalorder %s142, %s145
      %p151 = scmp.eq.s32.totalorder %s16, 0
      %p152 = por %p150, %p151
      %p153 = scmp.ne.s32.totalorder %s142, %s145
      %p154 = scmp.eq.s32.totalorder %s21, 2
      %p155 = por %p153, %p154
      %p156 = scmp.ne.s32.totalorder %s145, %s146
      %p157 = scmp.eq.s32.totalorder %s21, 0
      %p158 = por %p156, %p157
      %p159 = scmp.ne.s32.totalorder %s145, %s146
      %p160 = scmp.eq.s32.totalorder %s22, 2
      %p161 = por %p159, %p160
      %p163 = scmp.ne.s32.totalorder %s146, %s162
      %p164 = scmp.eq.s32.totalorder %s22, 0
      %p165 = por %p163, %p164
      %p166 = scmp.le.s32.totalorder 1, %s16
      %p167 = scmp.lt.s32.totalorder %s16, 4
      %p168 = pnand %p166, %p167
      %p169 = pneg %p168
      // Predicated region
      $region9: #{tpu_custom_call.1} parent=5 // pred_check
        _
      $region10: #{tpu_custom_call.1} parent=5 // pred_check_branch
        %171 = sbr.rel (%p168) target = $region12
      $region11: #{tpu_custom_call.1} parent=5 // pred_region
        %s172 = ssub.s32 %s16, 1
        // Predicated region
        $region13: #{tpu_custom_call.1} parent=11 // pred_check
          %p173 = pneg %p70
        $region14: #{tpu_custom_call.1} parent=11 // pred_check_branch
          %175 = sbr.rel (%p173) target = $region16
        $region15: #{tpu_custom_call.1} parent=11 // pred_region
          %s176 = smul.u32 2, %s29
          %s178 = ssub.s32 128, 128
          %179 = vsyncadd [#allocation4], %s178
          %s180 = sadd.s32 %s30, %s176
          %s181 = smul.addr %s180, 64
          %s182 = scalar_lea.hbm %s0, %s181
          %s183 = sshll.u32 [#allocation3], 4
          %s184 = int_to_ptr.vmem [resolvable:$true] %s183
          %189 = dma.hbm_to_vmem [thread:$0]  %s182, 128, %s184, [#allocation4], 64, 64, 4
        $region16: #{tpu_custom_call.1} parent=11 // pred_fallthru
          _
      $region12: #{tpu_custom_call.1} parent=5 // pred_fallthru
        _
      %p190 = scmp.lt.s32.totalorder %s16, 3
      // Predicated region
      $region17: #{tpu_custom_call.1} parent=5 // pred_check
        %p191 = pneg %p190
      $region18: #{tpu_custom_call.1} parent=5 // pred_check_branch
        %193 = sbr.rel (%p191) target = $region20
      $region19: #{tpu_custom_call.1} parent=5 // pred_region
        // Predicated region
        $region21: #{tpu_custom_call.1} parent=19 // pred_check
          %p194 = pneg %p94
        $region22: #{tpu_custom_call.1} parent=19 // pred_check_branch
          %196 = sbr.rel (%p194) target = $region24
        $region23: #{tpu_custom_call.1} parent=19 // pred_region
          %s197 = sand.u32 %s84, 1
          %s198 = scalar_lea.sflag [#allocation7], %s197
          %s199 = sand.u32 %s84, 1
          %s200 = smul.addr %s199, 16
          %s201 = scalar_lea.vmem [#allocation6], %s200
          %s202 = smul.u32 4, %s26
          %s204 = ssub.s32 256, 256
          %205 = vsyncadd %s198, %s204
          %s206 = sadd.s32 %s24, %s202
          %s207 = smul.addr %s23, 4
          %s208 = sadd.s32 %s206, %s207
          %s209 = smul.addr %s208, 64
          %s210 = scalar_lea.hbm %s1, %s209
          %s211 = sshll.u32 %s201, 4
          %s212 = int_to_ptr.vmem [resolvable:$true] %s211
          %217 = dma.hbm_to_vmem [thread:$0]  %s210, 256, %s212, %s198, 64, 64, 4
        $region24: #{tpu_custom_call.1} parent=19 // pred_fallthru
          _
        // Predicated region
        $region25: #{tpu_custom_call.1} parent=19 // pred_check
          %p218 = pneg %p122
        $region26: #{tpu_custom_call.1} parent=19 // pred_check_branch
          %220 = sbr.rel (%p218) target = $region28
        $region27: #{tpu_custom_call.1} parent=19 // pred_region
          %p221 = scmp.lt.s32.totalorder %s23, 2
          %s222 = scalar_select %p221, %s23, 2
          %p223 = scmp.lt.s32.totalorder %s24, 0
          %s224 = scalar_select %p223, %s24, 0
          %s225 = sadd.s32 %s224, %s222
          %s226 = scalar_lea.vmem %s2, %s225
        $region28: #{tpu_custom_call.1} parent=19 // pred_fallthru
          _
      $region20: #{tpu_custom_call.1} parent=5 // pred_fallthru
        _
      %p227 = scmp.le.s32.totalorder 1, %s16
      %p228 = scmp.lt.s32.totalorder %s16, 4
      %p229 = pnand %p227, %p228
      %p230 = pneg %p229
      // Predicated region
      $region29: #{tpu_custom_call.1} parent=5 // pred_check
        _
      $region30: #{tpu_custom_call.1} parent=5 // pred_check_branch
        %232 = sbr.rel (%p229) target = $region32
      $region31: #{tpu_custom_call.1} parent=5 // pred_region
        %s233 = ssub.s32 %s16, 1
        // Predicated region
        $region33: #{tpu_custom_call.1} parent=31 // pred_check
          %p234 = pneg %p70
        $region34: #{tpu_custom_call.1} parent=31 // pred_check_branch
          %236 = sbr.rel (%p234) target = $region36
        $region35: #{tpu_custom_call.1} parent=31 // pred_region
          %237 = dma.done [#allocation4], 128
        $region36: #{tpu_custom_call.1} parent=31 // pred_fallthru
          _
        %s238 = sand.u32 %s87, 1
        %s239 = scalar_lea.sflag [#allocation7], %s238
        %s240 = sand.u32 %s87, 1
        %s241 = smul.addr %s240, 16
        %s242 = scalar_lea.vmem [#allocation6], %s241
        // Predicated region
        $region37: #{tpu_custom_call.1} parent=31 // pred_check
          %p243 = pneg %p100
        $region38: #{tpu_custom_call.1} parent=31 // pred_check_branch
          %245 = sbr.rel (%p243) target = $region40
        $region39: #{tpu_custom_call.1} parent=31 // pred_region
          %246 = dma.done %s239, 256
        $region40: #{tpu_custom_call.1} parent=31 // pred_fallthru
          _
        %p247 = pneg %p70
        %p248 = pneg %p67
        %s249 = sand.u32 %s87, 1
        %s250 = scalar_lea.sflag [#allocation7], %s249
        %s251 = sand.u32 %s87, 1
        %s252 = smul.addr %s251, 16
        %s253 = scalar_lea.vmem [#allocation6], %s252
        %p254 = pneg %p100
        %p255 = pneg %p97
        %p256 = scmp.lt.s32.totalorder %s27, 2
        %s257 = scalar_select %p256, %s27, 2
        %p258 = scmp.lt.s32.totalorder %s28, 0
        %s259 = scalar_select %p258, %s28, 0
        %s260 = sadd.s32 %s259, %s257
        %s261 = scalar_lea.vmem %s2, %s260
        %p262 = pneg %p128
        %p263 = pneg %p125
        %p264 = pneg %p158
        %p265 = pneg %p155
        %s266 = sand.u32 %s145, 1
        %s267 = scalar_lea.sflag [#allocation5], %s266
        %s268 = sand.u32 %s145, 1
        %s269 = smul.addr %s268, 8
        %s270 = scalar_lea.vmem [#allocation8], %s269
        %s271 = smul.u32 2, %s29
        %s272 = smul.u32 4, %s30
        %p273 = scmp.lt.s32.totalorder %s27, 2
        %s274 = scalar_select %p273, %s27, 2
        %p275 = scmp.lt.s32.totalorder %s28, 0
        %s276 = scalar_select %p275, %s28, 0
        %s277 = sadd.s32 %s276, %s274
        %s278 = scalar_lea.vmem %s2, %s277
        %s279 = smul.u32 2, %s29
        %p281 = scmp.eq.s32.totalorder %s30, 0
        // Predicated region
        $region41: #{tpu_custom_call.1} parent=31 // pred_check
          %p282 = pneg %p281
        $region42: #{tpu_custom_call.1} parent=31 // pred_check_branch
          %284 = sbr.rel (%p282) target = $region44
        $region43: #{tpu_custom_call.1} parent=31 // pred_region
          %vm285 = vcmask 261120
          %286 = vst.msk [vmem:[#allocation2] sm:$0xff] %vm285, 0.0
          %287 = vst.msk [vmem:[#allocation2 + $0x8] sm:$0xff] %vm285, 0.0
        $region44: #{tpu_custom_call.1} parent=31 // pred_fallthru
          _
        %v288 = vld [vmem:[#allocation2] sm:$0xff]
        %v289 = vld [vmem:[#allocation2 + $0x8] sm:$0xff]
        %v290 = vld [vmem:[#allocation3] sm:$0xf]
        %v291 = vld [vmem:[#allocation3 + $0x4] sm:$0xf]
        %v292 = vld [vmem:[%s242] sm:$0xf]
        %v293 = vld [vmem:[%s242 + $0x4] sm:$0xf]
        %v294 = vld [vmem:[%s242 + $0x8] sm:$0xf]
        %v295 = vld [vmem:[%s242 + $0xc] sm:$0xf]
        %v298 = vunpack.c.l.b16 %v290
        %v299 = vunpack.c.l.b16 %v291
        %v300 = vpack.c.b16 %v299, %v298
        %v305 = vunpack.c.l.b16 %v292
        %v306 = vunpack.c.l.b16 %v293
        %v307 = vunpack.c.l.b16 %v294
        %v308 = vunpack.c.l.b16 %v295
        %v309 = vpack.c.b16 %v306, %v305
        %v310 = vpack.c.b16 %v308, %v307
        %vm313 = vcmask 261120
        %v315 = vsel %vm313, %v300, 0
        %317 = vmatprep.subr.bf16.mxu0 0
        %318 = vmatpush1.bf16.msra.mxu0 0
        %319 = vmatprep.subr.bf16.mxu0 0
        %320 = vmatpush1.bf16.msra.mxu0 0
        %321 = vmatprep.subr.bf16.mxu0 0
        %322 = vmatpush1.bf16.msra.mxu0 0
        %323 = vmatprep.subr.bf16.mxu0 0
        %324 = vmatpush1.bf16.msra.mxu0 0
        %325 = vmatprep.subr.bf16.mxu0 0
        %326 = vmatpush1.bf16.msra.mxu0 0
        %327 = vmatprep.subr.bf16.mxu0 0
        %328 = vmatpush1.bf16.msra.mxu0 0
        %329 = vmatprep.subr.bf16.mxu0 0
        %330 = vmatpush1.bf16.msra.mxu0 %v310
        %331 = vmatprep.subr.bf16.mxu0 0
        %332 = vmatpush1.bf16.msra.mxu0 %v309
        %333 = vmatprep.subr.bf16.mxu0 0
        %334 = vmatpush2.bf16.msra.mxu0 0
        %335 = vmatprep.subr.bf16.mxu0 0
        %336 = vmatpush2.bf16.msra.mxu0 0
        %337 = vmatprep.subr.bf16.mxu0 0
        %338 = vmatpush2.bf16.msra.mxu0 0
        %339 = vmatprep.subr.bf16.mxu0 0
        %340 = vmatpush2.bf16.msra.mxu0 0
        %341 = vmatprep.subr.bf16.mxu0 0
        %342 = vmatpush2.bf16.msra.mxu0 0
        %343 = vmatprep.subr.bf16.mxu0 0
        %344 = vmatpush2.bf16.msra.mxu0 0
        %345 = vmatprep.subr.bf16.mxu0 0
        %346 = vmatpush2.bf16.msra.mxu0 0
        %347 = vmatprep.subr.bf16.mxu0 0
        %348 = vmatpush2.bf16.msra.mxu0 0
        %349 = vmatprep.mubr.bf16.mxu0 0
        %350 = vmatmul.mubr.bf16.gmra.mxu0 %v315
        %v351 = vpop.f32.mrf.mxu0
        %v352 = vadd.f32 0.0, %v351
        %v353 = vpop.f32.mrf.mxu0
        %v354 = vpop.f32.mrf.mxu0
        %v355 = vadd.f32 0.0, %v354
        %v356 = vpop.f32.mrf.mxu0
        %357 = vdwg.mxu0
        %v358 = vadd.f32 %v288, %v352
        %v359 = vadd.f32 %v289, %v355
        %360 = vst.msk [vmem:[#allocation2] sm:$0xff] %vm313, %v358
        %361 = vst.msk [vmem:[#allocation2 + $0x8] sm:$0xff] %vm313, %v359
        // Predicated region
        $region45: #{tpu_custom_call.1} parent=31 // pred_check
          %p362 = pneg %p281
        $region46: #{tpu_custom_call.1} parent=31 // pred_check_branch
          %364 = sbr.rel (%p362) target = $region48
        $region47: #{tpu_custom_call.1} parent=31 // pred_region
          %v365 = vld [vmem:[#allocation2] sm:$0xff]
          %v366 = vld [vmem:[#allocation2 + $0x8] sm:$0xff]
          %v367 = vld [vmem:[%s278] sm:$0x1]
          %v369 = vlaneseq
          %v370 = vshrl.u32 %v369, 7
          %v371 = vsub.s32 0, %v370
          %v372 = vrot.slane %v367, %v371
          %v374 = vadd.f32 %v365, %v372
          %v375 = vadd.f32 %v366, %v372
          %v376 = vpack.c.bf16 %v375, %v374
          %v378 = vunpack.c.l.b16 %v376
          %v379 = vunpack.c.h.b16 %v376
          %v380 = vpack.c.b16 %v378, %v378
          %v381 = vpack.c.b16 %v379, %v379
          %vm384 = vcmask 257024
          %385 = vst.msk [vmem:[%s270] sm:$0xf] %vm384, %v380
          %386 = vst.msk [vmem:[%s270 + $0x4] sm:$0xf] %vm384, %v381
        $region48: #{tpu_custom_call.1} parent=31 // pred_fallthru
          _
        %s387 = sand.u32 %s145, 1
        %s388 = scalar_lea.sflag [#allocation5], %s387
        %s389 = sand.u32 %s145, 1
        %s390 = smul.addr %s389, 8
        %s391 = scalar_lea.vmem [#allocation8], %s390
        // Predicated region
        $region49: #{tpu_custom_call.1} parent=31 // pred_check
          %p392 = pneg %p155
        $region50: #{tpu_custom_call.1} parent=31 // pred_check_branch
          %394 = sbr.rel (%p392) target = $region52
        $region51: #{tpu_custom_call.1} parent=31 // pred_region
          %s395 = smul.u32 2, %s29
          %s397 = ssub.s32 128, 128
          %398 = vsyncadd %s388, %s397
          %s399 = sadd.s32 %s28, %s395
          %s400 = smul.addr %s27, 2
          %s401 = sadd.s32 %s399, %s400
          %s402 = smul.addr %s401, 64
          %s403 = scalar_lea.hbm %s3, %s402
          %s404 = sshll.u32 %s391, 4
          %s405 = int_to_ptr.vmem [resolvable:$true] %s404
          %410 = dma.vmem_to_hbm [thread:$0]  %s405, 128, %s403, %s388, 64, 64, 4
        $region52: #{tpu_custom_call.1} parent=31 // pred_fallthru
          _
      $region32: #{tpu_custom_call.1} parent=5 // pred_fallthru
        _
      %p411 = scmp.le.s32.totalorder 2, %s16
      // Predicated region
      $region53: #{tpu_custom_call.1} parent=5 // pred_check
        %p412 = pneg %p411
      $region54: #{tpu_custom_call.1} parent=5 // pred_check_branch
        %414 = sbr.rel (%p412) target = $region56
      $region55: #{tpu_custom_call.1} parent=5 // pred_region
        %s415 = ssub.s32 %s16, 2
        // Predicated region
        $region57: #{tpu_custom_call.1} parent=55 // pred_check
          %p416 = pneg %p161
        $region58: #{tpu_custom_call.1} parent=55 // pred_check_branch
          %418 = sbr.rel (%p416) target = $region60
        $region59: #{tpu_custom_call.1} parent=55 // pred_region
          %s419 = sand.u32 %s146, 1
          %s420 = scalar_lea.sflag [#allocation5], %s419
          %s421 = sand.u32 %s146, 1
          %s422 = smul.addr %s421, 8
          %s423 = scalar_lea.vmem [#allocation8], %s422
          %424 = dma.done %s420, 128
        $region60: #{tpu_custom_call.1} parent=55 // pred_fallthru
          _
      $region56: #{tpu_custom_call.1} parent=5 // pred_fallthru
        _
    $region6: #{tpu_custom_call.1} parent=1 // loop_footer
      %s20 = sadd.s32 1, %s16
    $region7: #{tpu_custom_call.1} parent=1 // loop_footer_branch
      %15 = sbr.rel target = $region3
    $region8: #{tpu_custom_call.1} parent=1 // loop_exit
      _
    %425 = vsyncpa [#allocation4], 1
    %s426 = scalar_lea.sflag [#allocation4], 1
    %427 = vsyncpa %s426, 1
    %428 = vsyncpa [#allocation7], 1
    %s429 = scalar_lea.sflag [#allocation7], 1
    %430 = vsyncpa %s429, 1
    %431 = vsyncpa [#allocation5], 1
    %s432 = scalar_lea.sflag [#allocation5], 1
    %433 = vsyncpa %s432, 1

</llo_original>
